<compile_context>
chip_gen: v7x
topology: tpu7x:2x2x1
jax: 0.10.0
libtpu: 0.0.40
codegen_flags: <defaults>
</compile_context>

<pallas_src>
import jax
import jax.numpy as jnp
from jax.experimental import pallas as pl
from jax.experimental.pallas import tpu as pltpu


def _round_up(a, b):
    return ((a + b - 1) // b) * b


# ---------------------------------------------------------------------------
# Kernels
# ---------------------------------------------------------------------------
def _make_resident_kernel(nk, tk, acc_in_out):
    """w and x fully VMEM-resident; grid = (row tiles,); in-kernel k loop."""

    def kernel(x_i_ref, w_ref, x_all_ref, o_ref, t_ref, *maybe_acc):
        acc_ref = o_ref if acc_in_out else maybe_acc[0]
        acc_ref[...] = jnp.zeros_like(acc_ref)

        def step(w_blk, x_blk):
            # first dot: (tm, d) @ (d, tk) -> fp32, staged in compute dtype
            t_ref[...] = jnp.dot(
                x_i_ref[...], w_blk, preferred_element_type=jnp.float32
            ).astype(t_ref.dtype)
            # second dot: (tm, tk) @ (tk, d) -> fp32 accumulate
            acc_ref[...] += jnp.dot(
                t_ref[...], x_blk, preferred_element_type=jnp.float32)

        if nk == 1:
            step(w_ref[...], x_all_ref[...])
        elif nk <= 8:
            for kk in range(nk):                       # static, fully unrolled
                step(w_ref[:, kk * tk:(kk + 1) * tk],
                     x_all_ref[kk * tk:(kk + 1) * tk, :])
        else:
            @pl.loop(0, nk)
            def _(kk):
                off = pl.multiple_of(kk * tk, tk)
                step(w_ref[:, pl.ds(off, tk)],
                     x_all_ref[pl.ds(off, tk), :])

        if not acc_in_out:
            o_ref[...] = maybe_acc[0][...].astype(o_ref.dtype)

    return kernel


def _make_stream_kernel(acc_in_out):
    """Streaming path; grid = (row tiles, k tiles); k is the reduction axis."""

    def kernel(x_i_ref, w_ref, x_k_ref, o_ref, t_ref, *maybe_acc):
        acc_ref = o_ref if acc_in_out else maybe_acc[0]

        @pl.when(pl.program_id(1) == 0)
        def _init():
            acc_ref[...] = jnp.zeros_like(acc_ref)

        t_ref[...] = jnp.dot(
            x_i_ref[...], w_ref[...], preferred_element_type=jnp.float32
        ).astype(t_ref.dtype)
        acc_ref[...] += jnp.dot(
            t_ref[...], x_k_ref[...], preferred_element_type=jnp.float32)

        if not acc_in_out:
            @pl.when(pl.program_id(1) == pl.num_programs(1) - 1)
            def _store():
                o_ref[...] = maybe_acc[0][...].astype(o_ref.dtype)

    return kernel


# ---------------------------------------------------------------------------
# Wrapper
# ---------------------------------------------------------------------------
def anomalous_forward(x, w, r, *, compute_dtype=jnp.bfloat16,
                      block_m=512, block_k=256,
                      resident_operand_limit=16 * 1024 * 1024,
                      vmem_budget=40 * 1024 * 1024):
    """Pallas implementation of ANOMALOUSBase.forward: returns (x @ w @ x, r)."""
    n, d = x.shape
    assert w.shape == (d, n), f"w must be (d, n)=({d},{n}), got {w.shape}"

    out_dtype = x.dtype
    cdtype = jnp.dtype(compute_dtype) if compute_dtype is not None else jnp.dtype(x.dtype)
    cbytes = cdtype.itemsize
    obytes = jnp.dtype(out_dtype).itemsize
    acc_in_out = jnp.dtype(out_dtype) == jnp.dtype(jnp.float32)
    sub = max(8, 32 // cbytes)                # packed sublane granularity 8/16/32

    d_pad = _round_up(d, 128)                 # lane-dense output

    # ---- tile selection ----------------------------------------------------
    if n <= max(block_m, block_k):
        tm = tk = _round_up(n, sub)           # single row tile / single k tile
    else:
        tm = _round_up(max(block_m, 128), 128)
        tk = min(_round_up(max(block_k, 128), 128), tm)
        while tm % tk:
            tk -= 128                          # 128-multiple divisor of tm

    def _stream_bytes(tm_, tk_):
        b = 2 * tm_ * d_pad * cbytes           # x row tile (double-buffered)
        b += 2 * d_pad * tk_ * cbytes          # w k-slab
        b += 2 * tk_ * d_pad * cbytes          # x k-slab
        b += 2 * tm_ * d_pad * obytes          # output tile
        b += tm_ * tk_ * cbytes                # t staging scratch
        if not acc_in_out:
            b += tm_ * d_pad * 4
        return b

    # keep the streaming block footprint inside the VMEM budget (large d)
    while tm > 256 and _stream_bytes(tm, tk) > vmem_budget:
        tm -= 128
        while tm % tk:
            tk -= 128

    n_pad = _round_up(n, tm)

    # ---- resident-operand decision ------------------------------------------
    if n_pad % 256 == 0:
        tk_in = 256
    elif n_pad % 128 == 0:
        tk_in = 128
    else:
        tk_in = n_pad
    nk = n_pad // tk_in

    operand_bytes = 2 * n_pad * d_pad * cbytes            # w + x, one copy each
    resident_total = (2 * operand_bytes                   # conservatively 2-buffered
                      + 2 * tm * d_pad * cbytes           # x row tile
                      + 2 * tm * d_pad * obytes           # output tile
                      + tm * tk_in * cbytes)              # t staging
    if not acc_in_out:
        resident_total += tm * d_pad * 4
    use_resident = (operand_bytes <= resident_operand_limit
                    and resident_total <= vmem_budget)

    # ---- cast / pad (only when actually needed) ------------------------------
    x_c = x if x.dtype == cdtype else x.astype(cdtype)
    w_c = w if w.dtype == cdtype else w.astype(cdtype)
    if (n_pad, d_pad) != (n, d):
        x_p = jnp.pad(x_c, ((0, n_pad - n), (0, d_pad - d)))
        w_p = jnp.pad(w_c, ((0, d_pad - d), (0, n_pad - n)))
    else:
        x_p, w_p = x_c, w_c

    flops = 4 * n_pad * n_pad * d_pad
    vmem_est = resident_total if use_resident else _stream_bytes(tm, tk)
    vmem_limit = int(min(48 * 1024 * 1024,
                         max(32 * 1024 * 1024, 3 * vmem_est // 2)))

    scratch = [pltpu.VMEM((tm, tk_in if use_resident else tk), cdtype)]
    if not acc_in_out:
        scratch.append(pltpu.VMEM((tm, d_pad), jnp.float32))

    if use_resident:
        bytes_accessed = (2 * n_pad * d_pad * cbytes      # x row tiles + resident x
                          + n_pad * d_pad * cbytes        # w
                          + n_pad * d_pad * obytes)       # out
        out_p = pl.pallas_call(
            _make_resident_kernel(nk, tk_in, acc_in_out),
            out_shape=jax.ShapeDtypeStruct((n_pad, d_pad), out_dtype),
            grid=(n_pad // tm,),
            in_specs=[
                pl.BlockSpec((tm, d_pad), lambda i: (i, 0)),       # x row tile
                pl.BlockSpec((d_pad, n_pad), lambda i: (0, 0)),    # w (resident)
                pl.BlockSpec((n_pad, d_pad), lambda i: (0, 0)),    # x (resident)
            ],
            out_specs=pl.BlockSpec((tm, d_pad), lambda i: (i, 0)),
            scratch_shapes=scratch,
            compiler_params=pltpu.CompilerParams(
                dimension_semantics=("parallel",),
                vmem_limit_bytes=vmem_limit),
            cost_estimate=pl.CostEstimate(
                flops=flops, transcendentals=0, bytes_accessed=bytes_accessed),
        )(x_p, w_p, x_p)
    else:
        n_row_tiles = n_pad // tm
        bytes_accessed = (n_pad * d_pad * cbytes                       # x row tiles
                          + 2 * n_row_tiles * n_pad * d_pad * cbytes   # w + x per row tile
                          + n_pad * d_pad * obytes)                    # out
        out_p = pl.pallas_call(
            _make_stream_kernel(acc_in_out),
            out_shape=jax.ShapeDtypeStruct((n_pad, d_pad), out_dtype),
            grid=(n_pad // tm, n_pad // tk),
            in_specs=[
                pl.BlockSpec((tm, d_pad), lambda i, k: (i, 0)),   # x row tile (resident over k)
                pl.BlockSpec((d_pad, tk), lambda i, k: (0, k)),   # w k-slab
                pl.BlockSpec((tk, d_pad), lambda i, k: (k, 0)),   # x k-slab
            ],
            out_specs=pl.BlockSpec((tm, d_pad), lambda i, k: (i, 0)),
            scratch_shapes=scratch,
            compiler_params=pltpu.CompilerParams(
                dimension_semantics=("parallel", "arbitrary"),
                vmem_limit_bytes=vmem_limit),
            cost_estimate=pl.CostEstimate(
                flops=flops, transcendentals=0, bytes_accessed=bytes_accessed),
        )(x_p, w_p, x_p)

    out = out_p if (n_pad, d_pad) == (n, d) else out_p[:n, :d]
    # r is a parameter returned unchanged (no compute).
    return out, r


def _rel_err(a, b):
    return jnp.linalg.norm(a - b) / jnp.maximum(jnp.linalg.norm(b), 1e-30)


if __name__ == "__main__":
    key = jax.random.PRNGKey(0)
    k_x, k_w, k_r = jax.random.split(key, 3)

    # Small shapes consistent with the module: n nodes, d attributes.
    n, d = 16, 32
    x = jax.random.normal(k_x, (n, d), dtype=jnp.float32)
    w = jax.random.normal(k_w, (d, n), dtype=jnp.float32) * 0.1   # deterministic init
    r = jax.random.normal(k_r, (n, d), dtype=jnp.float32) * 0.1   # deterministic init

    ref = x @ w @ x

    # 1) exact-ish path (f32 compute), tiny single-tile resident kernel
    out_f32, r_out = anomalous_forward(x, w, r, compute_dtype=jnp.float32)
    jax.block_until_ready(out_f32)
    jax.block_until_ready(r_out)
    assert _rel_err(out_f32, ref) < 1e-2, "mismatch vs reference (small, f32)"
    assert jnp.array_equal(r_out, r), "r must be returned unchanged"

    # 2) default bf16-compute path on the same small problem
    out_bf, _ = anomalous_forward(x, w, r)
    jax.block_until_ready(out_bf)
    assert _rel_err(out_bf, ref) < 1e-2, "mismatch vs reference (small, bf16)"

    # 3) larger problem: resident path with multiple row tiles + in-kernel k loop
    n2, d2 = 640, 160
    x2 = jax.random.normal(k_x, (n2, d2), dtype=jnp.float32)
    w2 = jax.random.normal(k_w, (d2, n2), dtype=jnp.float32) * 0.1
    ref2 = x2 @ w2 @ x2
    out2, _ = anomalous_forward(x2, w2, r)
    jax.block_until_ready(out2)
    assert _rel_err(out2, ref2) < 1e-2, "mismatch vs reference (resident path)"

    # 4) same problem forced through the streaming (i, k) accumulator path
    out3, _ = anomalous_forward(x2, w2, r, block_m=256, block_k=128,
                                resident_operand_limit=0)
    jax.block_until_ready(out3)
    assert _rel_err(out3, ref2) < 1e-2, "mismatch vs reference (streaming path)"

    print("KERNEL_OK")
</pallas_src>

<mosaic_0001>
module attributes {stable_mosaic.version = 11 : i64} {
  func.func @kernel(%arg0: i32, %arg1: memref<16x128xf32, #tpu.memory_space<vmem>>, %arg2: memref<128x16xf32, #tpu.memory_space<vmem>>, %arg3: memref<16x128xf32, #tpu.memory_space<vmem>>, %arg4: memref<16x128xf32, #tpu.memory_space<vmem>>, %arg5: memref<16x16xf32, #tpu.memory_space<vmem>>) attributes {dimension_semantics = [#tpu.dimension_semantics<parallel>], iteration_bounds = array<i64: 1>, scalar_prefetch = 0 : i64, scratch_operands = 1 : i64, tpu.core_type = #tpu.core_type<tc>, window_params = [{transform_indices = @transform_0, window_bounds = array<i64: 16, 128>}, {pipeline_mode = #tpu.pipeline_mode<synchronous>, transform_indices = @transform_1, window_bounds = array<i64: 128, 16>}, {pipeline_mode = #tpu.pipeline_mode<synchronous>, transform_indices = @transform_2, window_bounds = array<i64: 16, 128>}, {transform_indices = @transform_3, window_bounds = array<i64: 16, 128>}]} {
    %cst = arith.constant 0.000000e+00 : f32
    %0 = vector.broadcast %cst : f32 to vector<16x128xf32>
    %c0 = arith.constant 0 : index
    %c0_0 = arith.constant 0 : index
    %1 = vector.load %arg4[%c0, %c0_0] : memref<16x128xf32, #tpu.memory_space<vmem>>, vector<16x128xf32>
    tpu.vector_store %arg4[%c0, %c0_0], %0 {strides = array<i32>} : memref<16x128xf32, #tpu.memory_space<vmem>>, vector<16x128xf32>,
    %c0_1 = arith.constant 0 : index
    %c0_2 = arith.constant 0 : index
    %2 = vector.load %arg2[%c0_1, %c0_2] : memref<128x16xf32, #tpu.memory_space<vmem>>, vector<128x16xf32>
    %c0_3 = arith.constant 0 : index
    %c0_4 = arith.constant 0 : index
    %3 = vector.load %arg3[%c0_3, %c0_4] : memref<16x128xf32, #tpu.memory_space<vmem>>, vector<16x128xf32>
    %c0_5 = arith.constant 0 : index
    %c0_6 = arith.constant 0 : index
    %4 = vector.load %arg1[%c0_5, %c0_6] : memref<16x128xf32, #tpu.memory_space<vmem>>, vector<16x128xf32>
    %cst_7 = arith.constant dense<0.000000e+00> : vector<16x16xf32>
    %5 = tpu.matmul %4, %2, %cst_7 {dimension_numbers = #tpu.dot_dimension_numbers<[1], [0], [0], [1], [0, 0, 1, 1], [], []>} : vector<16x128xf32>, vector<128x16xf32>, vector<16x16xf32> -> vector<16x16xf32>
    %c0_8 = arith.constant 0 : index
    %c0_9 = arith.constant 0 : index
    %6 = vector.load %arg5[%c0_8, %c0_9] : memref<16x16xf32, #tpu.memory_space<vmem>>, vector<16x16xf32>
    tpu.vector_store %arg5[%c0_8, %c0_9], %5 {strides = array<i32>} : memref<16x16xf32, #tpu.memory_space<vmem>>, vector<16x16xf32>,
    %c0_10 = arith.constant 0 : index
    %c0_11 = arith.constant 0 : index
    %7 = vector.load %arg4[%c0_10, %c0_11] : memref<16x128xf32, #tpu.memory_space<vmem>>, vector<16x128xf32>
    %c0_12 = arith.constant 0 : index
    %c0_13 = arith.constant 0 : index
    %8 = vector.load %arg5[%c0_12, %c0_13] : memref<16x16xf32, #tpu.memory_space<vmem>>, vector<16x16xf32>
    %cst_14 = arith.constant dense<0.000000e+00> : vector<16x128xf32>
    %9 = tpu.matmul %8, %3, %cst_14 {dimension_numbers = #tpu.dot_dimension_numbers<[1], [0], [0], [1], [0, 0, 1, 1], [], []>} : vector<16x16xf32>, vector<16x128xf32>, vector<16x128xf32> -> vector<16x128xf32>
    %10 = arith.addf %7, %9 : vector<16x128xf32>
    %c0_15 = arith.constant 0 : index
    %c0_16 = arith.constant 0 : index
    %11 = vector.load %arg4[%c0_15, %c0_16] : memref<16x128xf32, #tpu.memory_space<vmem>>, vector<16x128xf32>
    tpu.vector_store %arg4[%c0_15, %c0_16], %10 {strides = array<i32>} : memref<16x128xf32, #tpu.memory_space<vmem>>, vector<16x128xf32>,
    return
  }
  func.func @transform_0(%arg0: i32) -> (i32, i32) {
    %c0_i32 = arith.constant 0 : i32
    %c0_i32_0 = arith.constant 0 : i32
    return %arg0, %c0_i32 : i32, i32
  }
  func.func @transform_1(%arg0: i32) -> (i32, i32) {
    %c0_i32 = arith.constant 0 : i32
    %c0_i32_0 = arith.constant 0 : i32
    %c0_i32_1 = arith.constant 0 : i32
    return %c0_i32, %c0_i32_0 : i32, i32
  }
  func.func @transform_2(%arg0: i32) -> (i32, i32) {
    %c0_i32 = arith.constant 0 : i32
    %c0_i32_0 = arith.constant 0 : i32
    %c0_i32_1 = arith.constant 0 : i32
    return %c0_i32, %c0_i32_0 : i32, i32
  }
  func.func @transform_3(%arg0: i32) -> (i32, i32) {
    %c0_i32 = arith.constant 0 : i32
    %c0_i32_0 = arith.constant 0 : i32
    return %arg0, %c0_i32 : i32, i32
  }
}

</mosaic_0001>

<llo_original>
// kernel: tpu_custom_call.1
$region0: #{tpu_custom_call.1}
  #allocation0 [shape = 'u32[]', space=smem, size = 0x4, offset = 0x4, fixed_abs, tag = 'smem constant byte address 0x4 - core index']
  #allocation1 [shape = 'u32[144,128]{1,0:T(1,128)}', space=vmem, size = 0x12000, scoped, tag = 'internal scratch']
  #allocation2 [shape = 'f32[16,16]{1,0:T(8,128)}', space=vmem, size = 0x2000, scoped, tag = 'scratch operand']
  %s0 = inlined_call_operand.vmem [shape: f32[16,128], index: 0, kind: input, shape index: {}]
  %s1 = inlined_call_operand.vmem [shape: f32[128,16], index: 1, kind: input, shape index: {}]
  %s2 = inlined_call_operand.vmem [shape: f32[16,128], index: 2, kind: input, shape index: {}]
  %s3 = inlined_call_operand.hbm [shape: f32[16,128], index: 3, kind: output, shape index: {}]
  %s4 = sld [smem:[#allocation0]]
  $region22: #{tpu_custom_call.1} parent=0
    _
  %s6 = ssub.s32 1, %s4
  %s7 = scalar_select 0, %s6, %s4
  $region1: #{tpu_custom_call.1} parent=0
    #allocation3 [shape = 'u8[8192]{0}', space=vmem, size = 0x2000, scoped, tag = 'output window, operand 0, single buffered']
    #allocation4 [shape = 's32[1]{0}', space=sflag, size = 0x4, scoped, tag = 'scoped memory for tpu_custom_call.1']
    %8 = vsyncpa [#allocation4], 0
    // Predicated region
    $region2: #{tpu_custom_call.1} parent=1 // pred_check
      _
    $region3: #{tpu_custom_call.1} parent=1 // pred_check_branch
      %10 = sbr.rel (0) target = $region5
    $region4: #{tpu_custom_call.1} parent=1 // pred_region
      _
    $region5: #{tpu_custom_call.1} parent=1 // pred_fallthru
      _
    // Predicated region
    $region6: #{tpu_custom_call.1} parent=1 // pred_check
      _
    $region7: #{tpu_custom_call.1} parent=1 // pred_check_branch
      %12 = sbr.rel (0) target = $region9
    $region8: #{tpu_custom_call.1} parent=1 // pred_region
      _
    $region9: #{tpu_custom_call.1} parent=1 // pred_fallthru
      _
    // Predicated region
    $region10: #{tpu_custom_call.1} parent=1 // pred_check
      _
    $region11: #{tpu_custom_call.1} parent=1 // pred_check_branch
      %14 = sbr.rel (0) target = $region13
    $region12: #{tpu_custom_call.1} parent=1 // pred_region
      _
    $region13: #{tpu_custom_call.1} parent=1 // pred_fallthru
      _
    %15 = vst [vmem:[#allocation3] sm:$0xff] 0.0
    %16 = vst [vmem:[#allocation3 + $0x8] sm:$0xff] 0.0
    %v17 = vld [vmem:[%s1] sm:$0xff]
    %v18 = vld [vmem:[%s1 + $0x8] sm:$0xff]
    %v19 = vld [vmem:[%s1 + $0x10] sm:$0xff]
    %v20 = vld [vmem:[%s1 + $0x18] sm:$0xff]
    %v21 = vld [vmem:[%s1 + $0x20] sm:$0xff]
    %v22 = vld [vmem:[%s1 + $0x28] sm:$0xff]
    %v23 = vld [vmem:[%s1 + $0x30] sm:$0xff]
    %v24 = vld [vmem:[%s1 + $0x38] sm:$0xff]
    %v25 = vld [vmem:[%s1 + $0x40] sm:$0xff]
    %v26 = vld [vmem:[%s1 + $0x48] sm:$0xff]
    %v27 = vld [vmem:[%s1 + $0x50] sm:$0xff]
    %v28 = vld [vmem:[%s1 + $0x58] sm:$0xff]
    %v29 = vld [vmem:[%s1 + $0x60] sm:$0xff]
    %v30 = vld [vmem:[%s1 + $0x68] sm:$0xff]
    %v31 = vld [vmem:[%s1 + $0x70] sm:$0xff]
    %v32 = vld [vmem:[%s1 + $0x78] sm:$0xff]
    %v33 = vld [vmem:[%s2] sm:$0xff]
    %v34 = vld [vmem:[%s2 + $0x8] sm:$0xff]
    %v35 = vld [vmem:[%s0] sm:$0xff]
    %v36 = vld [vmem:[%s0 + $0x8] sm:$0xff]
    %37 = vmatprep.subr.mxu0 0.0
    %38 = vmatpush1.msra.mxu0 %v17
    %39 = vmatprep.subr.mxu0 0.0
    %40 = vmatpush1.msra.mxu0 %v18
    %41 = vmatprep.subr.mxu0 0.0
    %42 = vmatpush1.msra.mxu0 %v19
    %43 = vmatprep.subr.mxu0 0.0
    %44 = vmatpush1.msra.mxu0 %v20
    %45 = vmatprep.subr.mxu0 0.0
    %46 = vmatpush1.msra.mxu0 %v21
    %47 = vmatprep.subr.mxu0 0.0
    %48 = vmatpush1.msra.mxu0 %v22
    %49 = vmatprep.subr.mxu0 0.0
    %50 = vmatpush1.msra.mxu0 %v23
    %51 = vmatprep.subr.mxu0 0.0
    %52 = vmatpush1.msra.mxu0 %v24
    %53 = vmatprep.subr.mxu0 0.0
    %54 = vmatpush1.msra.mxu0 %v25
    %55 = vmatprep.subr.mxu0 0.0
    %56 = vmatpush1.msra.mxu0 %v26
    %57 = vmatprep.subr.mxu0 0.0
    %58 = vmatpush1.msra.mxu0 %v27
    %59 = vmatprep.subr.mxu0 0.0
    %60 = vmatpush1.msra.mxu0 %v28
    %61 = vmatprep.subr.mxu0 0.0
    %62 = vmatpush1.msra.mxu0 %v29
    %63 = vmatprep.subr.mxu0 0.0
    %64 = vmatpush1.msra.mxu0 %v30
    %65 = vmatprep.subr.mxu0 0.0
    %66 = vmatpush1.msra.mxu0 %v31
    %67 = vmatprep.subr.mxu0 0.0
    %68 = vmatpush1.msra.mxu0 %v32
    %69 = vmatprep.subr.mxu0 0.0
    %70 = vmatpush1.msra.mxu0 0.0
    %71 = vmatprep.subr.mxu0 0.0
    %72 = vmatpush1.msra.mxu0 0.0
    %73 = vmatprep.subr.mxu0 0.0
    %74 = vmatpush1.msra.mxu0 0.0
    %75 = vmatprep.subr.mxu0 0.0
    %76 = vmatpush1.msra.mxu0 0.0
    %77 = vmatprep.subr.mxu0 0.0
    %78 = vmatpush1.msra.mxu0 0.0
    %79 = vmatprep.subr.mxu0 0.0
    %80 = vmatpush1.msra.mxu0 0.0
    %81 = vmatprep.subr.mxu0 0.0
    %82 = vmatpush1.msra.mxu0 0.0
    %83 = vmatprep.subr.mxu0 0.0
    %84 = vmatpush1.msra.mxu0 0.0
    %85 = vmatprep.subr.mxu0 0.0
    %86 = vmatpush1.msra.mxu0 0.0
    %87 = vmatprep.subr.mxu0 0.0
    %88 = vmatpush1.msra.mxu0 0.0
    %89 = vmatprep.subr.mxu0 0.0
    %90 = vmatpush1.msra.mxu0 0.0
    %91 = vmatprep.subr.mxu0 0.0
    %92 = vmatpush1.msra.mxu0 0.0
    %93 = vmatprep.subr.mxu0 0.0
    %94 = vmatpush1.msra.mxu0 0.0
    %95 = vmatprep.subr.mxu0 0.0
    %96 = vmatpush1.msra.mxu0 0.0
    %97 = vmatprep.subr.mxu0 0.0
    %98 = vmatpush1.msra.mxu0 0.0
    %99 = vmatprep.subr.mxu0 0.0
    %100 = vmatpush1.msra.mxu0 0.0
    %101 = vmatprep.mubr.f32.mxu0 0.0
    %102 = vmatmul.mubr.f32.gmra.mrb[0].mxu0 %v35
    %v103 = vpop.f32.mrb[0].mxu0
    %v104 = vadd.f32 0.0, %v103
    %v105 = vpop.f32.mrb[0].mxu0
    %106 = vmatprep.mubr.f32.mxu0 0.0
    %107 = vmatmul.mubr.f32.gmra.mrb[0].mxu0 %v36
    %v108 = vpop.f32.mrb[0].mxu0
    %v109 = vadd.f32 0.0, %v108
    %v110 = vpop.f32.mrb[0].mxu0
    %111 = vdwg.mxu0
    %vm112 = vcmask 130048
    %113 = vst.msk [vmem:[#allocation2] sm:$0xff] %vm112, %v104
    %114 = vst.msk [vmem:[#allocation2 + $0x8] sm:$0xff] %vm112, %v109
    %v115 = vld [vmem:[#allocation3] sm:$0xff]
    %v116 = vld [vmem:[#allocation3 + $0x8] sm:$0xff]
    %v117 = vld [vmem:[#allocation2] sm:$0xff]
    %v118 = vld [vmem:[#allocation2 + $0x8] sm:$0xff]
    %v120 = vsel %vm112, %v117, 0
    %v123 = vsel %vm112, %v118, 0
    %125 = vmatprep.subr.mxu0 0.0
    %126 = vmatpush1.msra.mxu0 %v33
    %127 = vmatprep.subr.mxu0 0.0
    %128 = vmatpush1.msra.mxu0 %v34
    %129 = vmatprep.subr.mxu0 0.0
    %130 = vmatpush1.msra.mxu0 0.0
    %131 = vmatprep.subr.mxu0 0.0
    %132 = vmatpush1.msra.mxu0 0.0
    %133 = vmatprep.subr.mxu0 0.0
    %134 = vmatpush1.msra.mxu0 0.0
    %135 = vmatprep.subr.mxu0 0.0
    %136 = vmatpush1.msra.mxu0 0.0
    %137 = vmatprep.subr.mxu0 0.0
    %138 = vmatpush1.msra.mxu0 0.0
    %139 = vmatprep.subr.mxu0 0.0
    %140 = vmatpush1.msra.mxu0 0.0
    %141 = vmatprep.subr.mxu0 0.0
    %142 = vmatpush1.msra.mxu0 0.0
    %143 = vmatprep.subr.mxu0 0.0
    %144 = vmatpush1.msra.mxu0 0.0
    %145 = vmatprep.subr.mxu0 0.0
    %146 = vmatpush1.msra.mxu0 0.0
    %147 = vmatprep.subr.mxu0 0.0
    %148 = vmatpush1.msra.mxu0 0.0
    %149 = vmatprep.subr.mxu0 0.0
    %150 = vmatpush1.msra.mxu0 0.0
    %151 = vmatprep.subr.mxu0 0.0
    %152 = vmatpush1.msra.mxu0 0.0
    %153 = vmatprep.subr.mxu0 0.0
    %154 = vmatpush1.msra.mxu0 0.0
    %155 = vmatprep.subr.mxu0 0.0
    %156 = vmatpush1.msra.mxu0 0.0
    %157 = vmatprep.subr.mxu0 0.0
    %158 = vmatpush1.msra.mxu0 0.0
    %159 = vmatprep.subr.mxu0 0.0
    %160 = vmatpush1.msra.mxu0 0.0
    %161 = vmatprep.subr.mxu0 0.0
    %162 = vmatpush1.msra.mxu0 0.0
    %163 = vmatprep.subr.mxu0 0.0
    %164 = vmatpush1.msra.mxu0 0.0
    %165 = vmatprep.subr.mxu0 0.0
    %166 = vmatpush1.msra.mxu0 0.0
    %167 = vmatprep.subr.mxu0 0.0
    %168 = vmatpush1.msra.mxu0 0.0
    %169 = vmatprep.subr.mxu0 0.0
    %170 = vmatpush1.msra.mxu0 0.0
    %171 = vmatprep.subr.mxu0 0.0
    %172 = vmatpush1.msra.mxu0 0.0
    %173 = vmatprep.subr.mxu0 0.0
    %174 = vmatpush1.msra.mxu0 0.0
    %175 = vmatprep.subr.mxu0 0.0
    %176 = vmatpush1.msra.mxu0 0.0
    %177 = vmatprep.subr.mxu0 0.0
    %178 = vmatpush1.msra.mxu0 0.0
    %179 = vmatprep.subr.mxu0 0.0
    %180 = vmatpush1.msra.mxu0 0.0
    %181 = vmatprep.subr.mxu0 0.0
    %182 = vmatpush1.msra.mxu0 0.0
    %183 = vmatprep.subr.mxu0 0.0
    %184 = vmatpush1.msra.mxu0 0.0
    %185 = vmatprep.subr.mxu0 0.0
    %186 = vmatpush1.msra.mxu0 0.0
    %187 = vmatprep.subr.mxu0 0.0
    %188 = vmatpush1.msra.mxu0 0.0
    %189 = vmatprep.mubr.f32.mxu0 0.0
    %190 = vmatmul.mubr.f32.gmra.mrb[0].mxu0 %v120
    %v191 = vpop.f32.mrb[0].mxu0
    %v192 = vadd.f32 0.0, %v191
    %v193 = vpop.f32.mrb[0].mxu0
    %194 = vmatprep.mubr.f32.mxu0 0.0
    %195 = vmatmul.mubr.f32.gmra.mrb[0].mxu0 %v123
    %v196 = vpop.f32.mrb[0].mxu0
    %v197 = vadd.f32 0.0, %v196
    %v198 = vpop.f32.mrb[0].mxu0
    %199 = vdwg.mxu0
    %v200 = vadd.f32 %v115, %v192
    %v201 = vadd.f32 %v116, %v197
    %202 = vst [vmem:[#allocation3] sm:$0xff] %v200
    %203 = vst [vmem:[#allocation3 + $0x8] sm:$0xff] %v201
    // Predicated region
    $region14: #{tpu_custom_call.1} parent=1 // pred_check
      _
    $region15: #{tpu_custom_call.1} parent=1 // pred_check_branch
      %205 = sbr.rel (0) target = $region17
    $region16: #{tpu_custom_call.1} parent=1 // pred_region
      %s207 = ssub.s32 256, 256
      %208 = vsyncadd [#allocation4], %s207
      %s209 = sshll.u32 [#allocation3], 4
      %s210 = int_to_ptr.vmem [resolvable:$true] %s209
      %215 = dma.vmem_to_hbm [thread:$0]  %s210, 256, %s3, [#allocation4], 128, 128, 8
    $region17: #{tpu_custom_call.1} parent=1 // pred_fallthru
      _
    // Predicated region
    $region18: #{tpu_custom_call.1} parent=1 // pred_check
      _
    $region19: #{tpu_custom_call.1} parent=1 // pred_check_branch
      %217 = sbr.rel (0) target = $region21
    $region20: #{tpu_custom_call.1} parent=1 // pred_region
      %218 = dma.done [#allocation4], 256
    $region21: #{tpu_custom_call.1} parent=1 // pred_fallthru
      _
    %219 = vsyncpa [#allocation4], 1

</llo_original>
